<compile_context>
chip_gen: v7x
topology: tpu7x:2x2x1
jax: 0.10.0
libtpu: 0.0.40
codegen_flags: <defaults>
</compile_context>

<pallas_src>
import functools

import jax
import jax.numpy as jnp
from jax.experimental import pallas as pl
from jax.experimental.pallas import tpu as pltpu  # noqa: F401  (TPU backend)


def _fused_conv_kernel(x_ref, w_ref, b_ref, o_ref):
    """Whole fused conv as one MXU dot.

    x_ref: (M, K)  = (N*Ho, KH*Wp*Cin)   stacked activation rows
    w_ref: (K, C)  = (KH*Wp*Cin, Wo*Cout) banded, flattened weights
    b_ref: (1, C)  = (1, Wo*Cout)         bias tiled across output columns
    o_ref: (M, C)  = (N*Ho, Wo*Cout)      lane-dense output slab
    """
    acc = jnp.dot(
        x_ref[...], w_ref[...],
        precision=jax.lax.Precision.HIGHEST,
        preferred_element_type=jnp.float32,
    )
    o_ref[...] = (acc + b_ref[...]).astype(o_ref.dtype)


def _fused_conv_pallas(x_stack, w_flat, bias_cols):
    """Single grid-less pallas_call: all arrays live whole in VMEM."""
    m, k = x_stack.shape
    _, cols = w_flat.shape
    flops = 2 * m * k * cols
    bytes_accessed = 4 * (m * k + k * cols + cols + m * cols)
    return pl.pallas_call(
        _fused_conv_kernel,
        out_shape=jax.ShapeDtypeStruct((m, cols), jnp.float32),
        cost_estimate=pl.CostEstimate(
            flops=flops, transcendentals=0, bytes_accessed=bytes_accessed),
    )(x_stack, w_flat, bias_cols)


def init_split_conv2d(weight_oihw, bias, out_channels_per_part, input_hw,
                      stride=(1, 1), padding=(1, 1)):
    """Init-time precompute (runs once, like module __init__).

    Builds the banded, flattened weight matrix and tiled bias so the per-call
    forward only does the cheap x-side layout plumbing + one pallas_call.
    """
    # TODO(synk): stride > 1 would need a strided band-selection matrix; the
    # module instance under test (ResNet-style 3x3, stride 1) does not need it.
    assert stride == (1, 1), "kernel implemented for stride=1 convs"
    cout, cin, kh, kw = weight_oihw.shape
    assert len(out_channels_per_part) >= 2
    assert sum(out_channels_per_part) == cout
    assert all(c > 0 for c in out_channels_per_part)

    h, w = input_hw
    ph, pw = padding
    hp, wp = h + 2 * ph, w + 2 * pw
    ho, wo = hp - kh + 1, wp - kw + 1

    # Banded weights over the FULL Cout so the per-part channel concatenation
    # order of the original module is preserved exactly:
    #   w_flat[kh*Wp*Cin + p*Cin + ci, wo*Cout + co] = W[co, ci, kh, p - wo]
    #   (nonzero only for 0 <= p - wo < KW)
    # TODO(synk): this dense band is ~Wo/KW x larger than the true weights and
    # only ~1/KW nonzero; for real ResNet shapes (56x56, Cin=Cout=64) tile Wo
    # with a grid axis (per-tile band slice) or switch to KH*KW shifted dots
    # against the true (Cin, Cout) weight to stay within v7x's 64 MiB VMEM.
    w_hwio = jnp.transpose(weight_oihw.astype(jnp.float32), (2, 3, 1, 0))  # (KH,KW,Cin,Cout)
    wp_idx = jnp.arange(wp)[None, :, None]
    wo_idx = jnp.arange(wo)[None, None, :]
    kw_idx = jnp.arange(kw)[:, None, None]
    sel = (wp_idx == wo_idx + kw_idx).astype(jnp.float32)          # (KW, Wp, Wo)
    w_band = jnp.einsum('kpw,hkio->hpiwo', sel, w_hwio)            # (KH,Wp,Cin,Wo,Cout)
    w_flat = w_band.reshape(kh * wp * cin, wo * cout)              # (216, 128)

    bias_cols = jnp.tile(bias.astype(jnp.float32), wo).reshape(1, wo * cout)

    # SplitConv2d.__init__ bookkeeping (unused in forward(), kept for parity).
    is_input_channel_unpruned = (jnp.sum(weight_oihw, axis=(0, 2, 3)) != 0)

    return dict(
        w_flat=w_flat, bias_cols=bias_cols,
        cin=cin, cout=cout, kh=kh, kw=kw, ph=ph, pw=pw,
        hp=hp, wp=wp, ho=ho, wo=wo,
        out_channels_per_part=tuple(out_channels_per_part),
        is_input_channel_unpruned=is_input_channel_unpruned,
    )


def split_conv2d_forward(x_nchw, params):
    """Forward pass of SplitConv2d (== the original conv, channels in order).

    x_nchw: (N, Cin, H, W) float32.  Returns (N, Cout, Ho, Wo), identical to
    torch.cat([partial_conv(x) for ...], dim=1).
    """
    n = x_nchw.shape[0]
    cin, cout = params['cin'], params['cout']
    kh = params['kh']
    ph, pw = params['ph'], params['pw']
    ho, wo, wp = params['ho'], params['wo'], params['wp']

    # x-side layout plumbing (fused by XLA): NCHW -> padded NHWC -> stacked
    # kernel-row patches (N*Ho, KH*Wp*Cin).  This is the K-fold that lets the
    # kernel do a single (M,216)@(216,128) MXU dot.
    x_nhwc = jnp.transpose(x_nchw, (0, 2, 3, 1)).astype(jnp.float32)
    x_pad = jnp.pad(x_nhwc, ((0, 0), (ph, ph), (pw, pw), (0, 0)))
    rows = [x_pad[:, r:r + ho, :, :].reshape(n, ho, wp * cin) for r in range(kh)]
    x_stack = jnp.concatenate(rows, axis=-1).reshape(n * ho, kh * wp * cin)

    y = _fused_conv_pallas(x_stack, params['w_flat'], params['bias_cols'])
    y = y.reshape(n, ho, wo, cout)
    return jnp.transpose(y, (0, 3, 1, 2))                           # back to NCHW


if __name__ == "__main__":
    # Shapes consistent with the module: Conv2d(4, 8, 3, stride=1, padding=1,
    # bias=True) split into parts [2, 3, 3].
    key = jax.random.PRNGKey(0)
    kx, kw_, kb = jax.random.split(key, 3)

    N, CIN, H, W = 2, 4, 16, 16
    COUT, KH, KW = 8, 3, 3
    parts = [2, 3, 3]

    x = jax.random.normal(kx, (N, CIN, H, W), dtype=jnp.float32)
    weight = jax.random.normal(kw_, (COUT, CIN, KH, KW), dtype=jnp.float32) * 0.1
    bias = jax.random.normal(kb, (COUT,), dtype=jnp.float32) * 0.1

    # init-time precompute (band weights / bias tiling cached, not per-call)
    params = init_split_conv2d(weight, bias, parts, input_hw=(H, W),
                               stride=(1, 1), padding=(1, 1))

    fwd = jax.jit(functools.partial(split_conv2d_forward, params=params))
    y = fwd(x)
    jax.block_until_ready(y)

    # sanity check: split-and-concat over full channel order == the full conv
    y_ref = jax.lax.conv_general_dilated(
        x, weight, window_strides=(1, 1), padding=[(1, 1), (1, 1)],
        dimension_numbers=("NCHW", "OIHW", "NCHW"),
        precision=jax.lax.Precision.HIGHEST,
    ) + bias[None, :, None, None]
    assert y.shape == (N, COUT, H, W)
    assert jnp.allclose(y, y_ref, atol=1e-3, rtol=1e-3), \
        float(jnp.max(jnp.abs(y - y_ref)))

    print("KERNEL_OK")
</pallas_src>

<mosaic_0001>
module attributes {stable_mosaic.version = 11 : i64} {
  func.func @_fused_conv_kernel(%arg0: memref<32x216xf32, #tpu.memory_space<vmem>>, %arg1: memref<216x128xf32, #tpu.memory_space<vmem>>, %arg2: memref<1x128xf32, #tpu.memory_space<vmem>>, %arg3: memref<32x128xf32, #tpu.memory_space<vmem>>) attributes {dimension_semantics = [], scalar_prefetch = 0 : i64, scratch_operands = 0 : i64, tpu.core_type = #tpu.core_type<tc>} {
    %c0 = arith.constant 0 : index
    %c0_0 = arith.constant 0 : index
    %0 = vector.load %arg0[%c0, %c0_0] : memref<32x216xf32, #tpu.memory_space<vmem>>, vector<32x216xf32>
    %c0_1 = arith.constant 0 : index
    %c0_2 = arith.constant 0 : index
    %1 = vector.load %arg1[%c0_1, %c0_2] : memref<216x128xf32, #tpu.memory_space<vmem>>, vector<216x128xf32>
    %cst = arith.constant dense<0.000000e+00> : vector<32x128xf32>
    %2 = tpu.matmul %0, %1, %cst {dimension_numbers = #tpu.dot_dimension_numbers<[1], [0], [0], [1], [0, 0, 1, 1], [], []>, precision = #tpu.contract_precision<fp32>} : vector<32x216xf32>, vector<216x128xf32>, vector<32x128xf32> -> vector<32x128xf32>
    %c0_3 = arith.constant 0 : index
    %c0_4 = arith.constant 0 : index
    %3 = vector.load %arg2[%c0_3, %c0_4] : memref<1x128xf32, #tpu.memory_space<vmem>>, vector<1x128xf32>
    %4 = vector.broadcast %3 : vector<1x128xf32> to vector<32x128xf32>
    %5 = arith.addf %2, %4 : vector<32x128xf32>
    %c0_5 = arith.constant 0 : index
    %c0_6 = arith.constant 0 : index
    %6 = vector.load %arg3[%c0_5, %c0_6] : memref<32x128xf32, #tpu.memory_space<vmem>>, vector<32x128xf32>
    tpu.vector_store %arg3[%c0_5, %c0_6], %5 {strides = array<i32>} : memref<32x128xf32, #tpu.memory_space<vmem>>, vector<32x128xf32>,
    return
  }
}

</mosaic_0001>

<llo_original>
// kernel: split_conv2d_forward.1
$region0: #{split_conv2d_forward.1}
  #allocation0 [shape = 'u32[]', space=smem, size = 0x4, offset = 0x4, fixed_abs, tag = 'smem constant byte address 0x4 - core index']
  #allocation1 [shape = 'u32[144,128]{1,0:T(1,128)}', space=vmem, size = 0x12000, scoped, tag = 'internal scratch']
  %s0 = inlined_call_operand.vmem [shape: f32[32,216], index: 0, kind: input, shape index: {}]
  %s1 = inlined_call_operand.vmem [shape: f32[216,128], index: 1, kind: input, shape index: {}]
  %s2 = inlined_call_operand.vmem [shape: f32[1,128], index: 2, kind: input, shape index: {}]
  %s3 = inlined_call_operand.vmem [shape: f32[32,128], index: 3, kind: output, shape index: {}]
  %s4 = sld [smem:[#allocation0]]
  $region22: #{split_conv2d_forward.1} parent=0
    _
  %s6 = ssub.s32 1, %s4
  %s7 = scalar_select 0, %s6, %s4
  // Predicated region
  $region2: #{split_conv2d_forward.1} parent=0 // pred_check
    _
  $region3: #{split_conv2d_forward.1} parent=0 // pred_check_branch
    %9 = sbr.rel (0) target = $region5
  $region4: #{split_conv2d_forward.1} parent=0 // pred_region
    _
  $region5: #{split_conv2d_forward.1} parent=0 // pred_fallthru
    _
  // Predicated region
  $region6: #{split_conv2d_forward.1} parent=0 // pred_check
    _
  $region7: #{split_conv2d_forward.1} parent=0 // pred_check_branch
    %11 = sbr.rel (0) target = $region9
  $region8: #{split_conv2d_forward.1} parent=0 // pred_region
    _
  $region9: #{split_conv2d_forward.1} parent=0 // pred_fallthru
    _
  // Predicated region
  $region10: #{split_conv2d_forward.1} parent=0 // pred_check
    _
  $region11: #{split_conv2d_forward.1} parent=0 // pred_check_branch
    %13 = sbr.rel (0) target = $region13
  $region12: #{split_conv2d_forward.1} parent=0 // pred_region
    _
  $region13: #{split_conv2d_forward.1} parent=0 // pred_fallthru
    _
  %v14 = vld [vmem:[%s0] sm:$0xff]
  %v15 = vld [vmem:[%s0 + $0x8] sm:$0xff]
  %v16 = vld [vmem:[%s0 + $0x10] sm:$0xff]
  %v17 = vld [vmem:[%s0 + $0x18] sm:$0xff]
  %v18 = vld [vmem:[%s0 + $0x20] sm:$0xff]
  %v19 = vld [vmem:[%s0 + $0x28] sm:$0xff]
  %v20 = vld [vmem:[%s0 + $0x30] sm:$0xff]
  %v21 = vld [vmem:[%s0 + $0x38] sm:$0xff]
  %v22 = vld [vmem:[%s1] sm:$0xff]
  %v23 = vld [vmem:[%s1 + $0x8] sm:$0xff]
  %v24 = vld [vmem:[%s1 + $0x10] sm:$0xff]
  %v25 = vld [vmem:[%s1 + $0x18] sm:$0xff]
  %v26 = vld [vmem:[%s1 + $0x20] sm:$0xff]
  %v27 = vld [vmem:[%s1 + $0x28] sm:$0xff]
  %v28 = vld [vmem:[%s1 + $0x30] sm:$0xff]
  %v29 = vld [vmem:[%s1 + $0x38] sm:$0xff]
  %v30 = vld [vmem:[%s1 + $0x40] sm:$0xff]
  %v31 = vld [vmem:[%s1 + $0x48] sm:$0xff]
  %v32 = vld [vmem:[%s1 + $0x50] sm:$0xff]
  %v33 = vld [vmem:[%s1 + $0x58] sm:$0xff]
  %v34 = vld [vmem:[%s1 + $0x60] sm:$0xff]
  %v35 = vld [vmem:[%s1 + $0x68] sm:$0xff]
  %v36 = vld [vmem:[%s1 + $0x70] sm:$0xff]
  %v37 = vld [vmem:[%s1 + $0x78] sm:$0xff]
  %v38 = vld [vmem:[%s1 + $0x80] sm:$0xff]
  %v39 = vld [vmem:[%s1 + $0x88] sm:$0xff]
  %v40 = vld [vmem:[%s1 + $0x90] sm:$0xff]
  %v41 = vld [vmem:[%s1 + $0x98] sm:$0xff]
  %v42 = vld [vmem:[%s1 + $0xa0] sm:$0xff]
  %v43 = vld [vmem:[%s1 + $0xa8] sm:$0xff]
  %v44 = vld [vmem:[%s1 + $0xb0] sm:$0xff]
  %v45 = vld [vmem:[%s1 + $0xb8] sm:$0xff]
  %v46 = vld [vmem:[%s1 + $0xc0] sm:$0xff]
  %v47 = vld [vmem:[%s1 + $0xc8] sm:$0xff]
  %v48 = vld [vmem:[%s1 + $0xd0] sm:$0xff]
  %v49 = vld [vmem:[%s2] sm:$0x1]
  %v51 = vlaneseq
  %v52 = vshrl.u32 %v51, 7
  %v53 = vsub.s32 0, %v52
  %v54 = vrot.slane %v49, %v53
  %vm56 = vcmask 719872
  %v58 = vsel %vm56, %v15, 0
  %v61 = vsel %vm56, %v17, 0
  %v64 = vsel %vm56, %v19, 0
  %v67 = vsel %vm56, %v21, 0
  %69 = vmatprep.subr.mxu0 0.0
  %v70 = vand.u32 %v22, 4294901760
  %71 = vmatpush1.msra.mxu0 %v70
  %72 = vmatprep.subr.mxu0 0.0
  %v73 = vand.u32 %v23, 4294901760
  %74 = vmatpush1.msra.mxu0 %v73
  %75 = vmatprep.subr.mxu0 0.0
  %v76 = vand.u32 %v24, 4294901760
  %77 = vmatpush1.msra.mxu0 %v76
  %78 = vmatprep.subr.mxu0 0.0
  %v79 = vand.u32 %v25, 4294901760
  %80 = vmatpush1.msra.mxu0 %v79
  %81 = vmatprep.subr.mxu0 0.0
  %v82 = vand.u32 %v26, 4294901760
  %83 = vmatpush1.msra.mxu0 %v82
  %84 = vmatprep.subr.mxu0 0.0
  %v85 = vand.u32 %v27, 4294901760
  %86 = vmatpush1.msra.mxu0 %v85
  %87 = vmatprep.subr.mxu0 0.0
  %v88 = vand.u32 %v28, 4294901760
  %89 = vmatpush1.msra.mxu0 %v88
  %90 = vmatprep.subr.mxu0 0.0
  %v91 = vand.u32 %v29, 4294901760
  %92 = vmatpush1.msra.mxu0 %v91
  %93 = vmatprep.subr.mxu0 0.0
  %v94 = vand.u32 %v30, 4294901760
  %95 = vmatpush1.msra.mxu0 %v94
  %96 = vmatprep.subr.mxu0 0.0
  %v97 = vand.u32 %v31, 4294901760
  %98 = vmatpush1.msra.mxu0 %v97
  %99 = vmatprep.subr.mxu0 0.0
  %v100 = vand.u32 %v32, 4294901760
  %101 = vmatpush1.msra.mxu0 %v100
  %102 = vmatprep.subr.mxu0 0.0
  %v103 = vand.u32 %v33, 4294901760
  %104 = vmatpush1.msra.mxu0 %v103
  %105 = vmatprep.subr.mxu0 0.0
  %v106 = vand.u32 %v34, 4294901760
  %107 = vmatpush1.msra.mxu0 %v106
  %108 = vmatprep.subr.mxu0 0.0
  %v109 = vand.u32 %v35, 4294901760
  %110 = vmatpush1.msra.mxu0 %v109
  %111 = vmatprep.subr.mxu0 0.0
  %v112 = vand.u32 %v36, 4294901760
  %113 = vmatpush1.msra.mxu0 %v112
  %114 = vmatprep.subr.mxu0 0.0
  %v115 = vand.u32 %v37, 4294901760
  %116 = vmatpush1.msra.mxu0 %v115
  %117 = vmatprep.subr.mxu0 0.0
  %v118 = vand.u32 %v38, 4294901760
  %119 = vmatpush1.msra.mxu0 %v118
  %120 = vmatprep.subr.mxu0 0.0
  %v121 = vand.u32 %v39, 4294901760
  %122 = vmatpush1.msra.mxu0 %v121
  %123 = vmatprep.subr.mxu0 0.0
  %v124 = vand.u32 %v40, 4294901760
  %125 = vmatpush1.msra.mxu0 %v124
  %126 = vmatprep.subr.mxu0 0.0
  %v127 = vand.u32 %v41, 4294901760
  %128 = vmatpush1.msra.mxu0 %v127
  %129 = vmatprep.subr.mxu0 0.0
  %v130 = vand.u32 %v42, 4294901760
  %131 = vmatpush1.msra.mxu0 %v130
  %132 = vmatprep.subr.mxu0 0.0
  %v133 = vand.u32 %v43, 4294901760
  %134 = vmatpush1.msra.mxu0 %v133
  %135 = vmatprep.subr.mxu0 0.0
  %v136 = vand.u32 %v44, 4294901760
  %137 = vmatpush1.msra.mxu0 %v136
  %138 = vmatprep.subr.mxu0 0.0
  %v139 = vand.u32 %v45, 4294901760
  %140 = vmatpush1.msra.mxu0 %v139
  %141 = vmatprep.subr.mxu0 0.0
  %v142 = vand.u32 %v46, 4294901760
  %143 = vmatpush1.msra.mxu0 %v142
  %144 = vmatprep.subr.mxu0 0.0
  %v145 = vand.u32 %v47, 4294901760
  %146 = vmatpush1.msra.mxu0 %v145
  %147 = vmatprep.subr.mxu0 0.0
  %v148 = vand.u32 %v48, 4294901760
  %149 = vmatpush1.msra.mxu0 %v148
  %150 = vmatprep.subr.mxu0 0.0
  %151 = vmatpush1.msra.mxu0 0.0
  %152 = vmatprep.subr.mxu0 0.0
  %153 = vmatpush1.msra.mxu0 0.0
  %154 = vmatprep.subr.mxu0 0.0
  %155 = vmatpush1.msra.mxu0 0.0
  %156 = vmatprep.subr.mxu0 0.0
  %157 = vmatpush1.msra.mxu0 0.0
  %158 = vmatprep.subr.mxu0 0.0
  %159 = vmatpush1.msra.mxu0 0.0
  %v160 = vand.u32 %v58, 4294901760
  %v161 = vsub.f32 %v58, %v160
  %v162 = vand.u32 %v161, 4294901760
  %v163 = vsub.f32 %v161, %v162
  %v164 = vand.u32 %v163, 4294901760
  %165 = vmatprep.mubr.f32.mxu0 %v164
  %v166 = vand.u32 %v14, 4294901760
  %v167 = vsub.f32 %v14, %v166
  %v168 = vand.u32 %v167, 4294901760
  %v169 = vsub.f32 %v167, %v168
  %v170 = vand.u32 %v169, 4294901760
  %171 = vmatmul.mubr.f32.gmra.mrb[0].mxu0 %v170
  %v172 = vpop.f32.mrb[0].mxu0
  %v173 = vadd.f32 %v54, %v172
  %v174 = vpop.f32.mrb[0].mxu0
  %v175 = vand.u32 %v61, 4294901760
  %v176 = vsub.f32 %v61, %v175
  %v177 = vand.u32 %v176, 4294901760
  %v178 = vsub.f32 %v176, %v177
  %v179 = vand.u32 %v178, 4294901760
  %180 = vmatprep.mubr.f32.mxu0 %v179
  %v181 = vand.u32 %v16, 4294901760
  %v182 = vsub.f32 %v16, %v181
  %v183 = vand.u32 %v182, 4294901760
  %v184 = vsub.f32 %v182, %v183
  %v185 = vand.u32 %v184, 4294901760
  %186 = vmatmul.mubr.f32.gmra.mrb[0].mxu0 %v185
  %v187 = vpop.f32.mrb[0].mxu0
  %v188 = vadd.f32 %v54, %v187
  %v189 = vpop.f32.mrb[0].mxu0
  %v190 = vand.u32 %v64, 4294901760
  %v191 = vsub.f32 %v64, %v190
  %v192 = vand.u32 %v191, 4294901760
  %v193 = vsub.f32 %v191, %v192
  %v194 = vand.u32 %v193, 4294901760
  %195 = vmatprep.mubr.f32.mxu0 %v194
  %v196 = vand.u32 %v18, 4294901760
  %v197 = vsub.f32 %v18, %v196
  %v198 = vand.u32 %v197, 4294901760
  %v199 = vsub.f32 %v197, %v198
  %v200 = vand.u32 %v199, 4294901760
  %201 = vmatmul.mubr.f32.gmra.mrb[0].mxu0 %v200
  %v202 = vpop.f32.mrb[0].mxu0
  %v203 = vadd.f32 %v54, %v202
  %v204 = vpop.f32.mrb[0].mxu0
  %v205 = vand.u32 %v67, 4294901760
  %v206 = vsub.f32 %v67, %v205
  %v207 = vand.u32 %v206, 4294901760
  %v208 = vsub.f32 %v206, %v207
  %v209 = vand.u32 %v208, 4294901760
  %210 = vmatprep.mubr.f32.mxu0 %v209
  %v211 = vand.u32 %v20, 4294901760
  %v212 = vsub.f32 %v20, %v211
  %v213 = vand.u32 %v212, 4294901760
  %v214 = vsub.f32 %v212, %v213
  %v215 = vand.u32 %v214, 4294901760
  %216 = vmatmul.mubr.f32.gmra.mrb[0].mxu0 %v215
  %v217 = vpop.f32.mrb[0].mxu0
  %v218 = vadd.f32 %v54, %v217
  %v219 = vpop.f32.mrb[0].mxu0
  %220 = vdwg.mxu0
  %221 = vmatprep.subr.mxu0 0.0
  %v222 = vand.u32 %v22, 4294901760
  %v223 = vsub.f32 %v22, %v222
  %v224 = vand.u32 %v223, 4294901760
  %v225 = vsub.f32 %v223, %v224
  %v226 = vand.u32 %v225, 4294901760
  %227 = vmatpush1.msra.mxu0 %v226
  %228 = vmatprep.subr.mxu0 0.0
  %v229 = vand.u32 %v23, 4294901760
  %v230 = vsub.f32 %v23, %v229
  %v231 = vand.u32 %v230, 4294901760
  %v232 = vsub.f32 %v230, %v231
  %v233 = vand.u32 %v232, 4294901760
  %234 = vmatpush1.msra.mxu0 %v233
  %235 = vmatprep.subr.mxu0 0.0
  %v236 = vand.u32 %v24, 4294901760
  %v237 = vsub.f32 %v24, %v236
  %v238 = vand.u32 %v237, 4294901760
  %v239 = vsub.f32 %v237, %v238
  %v240 = vand.u32 %v239, 4294901760
  %241 = vmatpush1.msra.mxu0 %v240
  %242 = vmatprep.subr.mxu0 0.0
  %v243 = vand.u32 %v25, 4294901760
  %v244 = vsub.f32 %v25, %v243
  %v245 = vand.u32 %v244, 4294901760
  %v246 = vsub.f32 %v244, %v245
  %v247 = vand.u32 %v246, 4294901760
  %248 = vmatpush1.msra.mxu0 %v247
  %249 = vmatprep.subr.mxu0 0.0
  %v250 = vand.u32 %v26, 4294901760
  %v251 = vsub.f32 %v26, %v250
  %v252 = vand.u32 %v251, 4294901760
  %v253 = vsub.f32 %v251, %v252
  %v254 = vand.u32 %v253, 4294901760
  %255 = vmatpush1.msra.mxu0 %v254
  %256 = vmatprep.subr.mxu0 0.0
  %v257 = vand.u32 %v27, 4294901760
  %v258 = vsub.f32 %v27, %v257
  %v259 = vand.u32 %v258, 4294901760
  %v260 = vsub.f32 %v258, %v259
  %v261 = vand.u32 %v260, 4294901760
  %262 = vmatpush1.msra.mxu0 %v261
  %263 = vmatprep.subr.mxu0 0.0
  %v264 = vand.u32 %v28, 4294901760
  %v265 = vsub.f32 %v28, %v264
  %v266 = vand.u32 %v265, 4294901760
  %v267 = vsub.f32 %v265, %v266
  %v268 = vand.u32 %v267, 4294901760
  %269 = vmatpush1.msra.mxu0 %v268
  %270 = vmatprep.subr.mxu0 0.0
  %v271 = vand.u32 %v29, 4294901760
  %v272 = vsub.f32 %v29, %v271
  %v273 = vand.u32 %v272, 4294901760
  %v274 = vsub.f32 %v272, %v273
  %v275 = vand.u32 %v274, 4294901760
  %276 = vmatpush1.msra.mxu0 %v275
  %277 = vmatprep.subr.mxu0 0.0
  %v278 = vand.u32 %v30, 4294901760
  %v279 = vsub.f32 %v30, %v278
  %v280 = vand.u32 %v279, 4294901760
  %v281 = vsub.f32 %v279, %v280
  %v282 = vand.u32 %v281, 4294901760
  %283 = vmatpush1.msra.mxu0 %v282
  %284 = vmatprep.subr.mxu0 0.0
  %v285 = vand.u32 %v31, 4294901760
  %v286 = vsub.f32 %v31, %v285
  %v287 = vand.u32 %v286, 4294901760
  %v288 = vsub.f32 %v286, %v287
  %v289 = vand.u32 %v288, 4294901760
  %290 = vmatpush1.msra.mxu0 %v289
  %291 = vmatprep.subr.mxu0 0.0
  %v292 = vand.u32 %v32, 4294901760
  %v293 = vsub.f32 %v32, %v292
  %v294 = vand.u32 %v293, 4294901760
  %v295 = vsub.f32 %v293, %v294
  %v296 = vand.u32 %v295, 4294901760
  %297 = vmatpush1.msra.mxu0 %v296
  %298 = vmatprep.subr.mxu0 0.0
  %v299 = vand.u32 %v33, 4294901760
  %v300 = vsub.f32 %v33, %v299
  %v301 = vand.u32 %v300, 4294901760
  %v302 = vsub.f32 %v300, %v301
  %v303 = vand.u32 %v302, 4294901760
  %304 = vmatpush1.msra.mxu0 %v303
  %305 = vmatprep.subr.mxu0 0.0
  %v306 = vand.u32 %v34, 4294901760
  %v307 = vsub.f32 %v34, %v306
  %v308 = vand.u32 %v307, 4294901760
  %v309 = vsub.f32 %v307, %v308
  %v310 = vand.u32 %v309, 4294901760
  %311 = vmatpush1.msra.mxu0 %v310
  %312 = vmatprep.subr.mxu0 0.0
  %v313 = vand.u32 %v35, 4294901760
  %v314 = vsub.f32 %v35, %v313
  %v315 = vand.u32 %v314, 4294901760
  %v316 = vsub.f32 %v314, %v315
  %v317 = vand.u32 %v316, 4294901760
  %318 = vmatpush1.msra.mxu0 %v317
  %319 = vmatprep.subr.mxu0 0.0
  %v320 = vand.u32 %v36, 4294901760
  %v321 = vsub.f32 %v36, %v320
  %v322 = vand.u32 %v321, 4294901760
  %v323 = vsub.f32 %v321, %v322
  %v324 = vand.u32 %v323, 4294901760
  %325 = vmatpush1.msra.mxu0 %v324
  %326 = vmatprep.subr.mxu0 0.0
  %v327 = vand.u32 %v37, 4294901760
  %v328 = vsub.f32 %v37, %v327
  %v329 = vand.u32 %v328, 4294901760
  %v330 = vsub.f32 %v328, %v329
  %v331 = vand.u32 %v330, 4294901760
  %332 = vmatpush1.msra.mxu0 %v331
  %333 = vmatprep.subr.mxu0 0.0
  %v334 = vand.u32 %v38, 4294901760
  %v335 = vsub.f32 %v38, %v334
  %v336 = vand.u32 %v335, 4294901760
  %v337 = vsub.f32 %v335, %v336
  %v338 = vand.u32 %v337, 4294901760
  %339 = vmatpush1.msra.mxu0 %v338
  %340 = vmatprep.subr.mxu0 0.0
  %v341 = vand.u32 %v39, 4294901760
  %v342 = vsub.f32 %v39, %v341
  %v343 = vand.u32 %v342, 4294901760
  %v344 = vsub.f32 %v342, %v343
  %v345 = vand.u32 %v344, 4294901760
  %346 = vmatpush1.msra.mxu0 %v345
  %347 = vmatprep.subr.mxu0 0.0
  %v348 = vand.u32 %v40, 4294901760
  %v349 = vsub.f32 %v40, %v348
  %v350 = vand.u32 %v349, 4294901760
  %v351 = vsub.f32 %v349, %v350
  %v352 = vand.u32 %v351, 4294901760
  %353 = vmatpush1.msra.mxu0 %v352
  %354 = vmatprep.subr.mxu0 0.0
  %v355 = vand.u32 %v41, 4294901760
  %v356 = vsub.f32 %v41, %v355
  %v357 = vand.u32 %v356, 4294901760
  %v358 = vsub.f32 %v356, %v357
  %v359 = vand.u32 %v358, 4294901760
  %360 = vmatpush1.msra.mxu0 %v359
  %361 = vmatprep.subr.mxu0 0.0
  %v362 = vand.u32 %v42, 4294901760
  %v363 = vsub.f32 %v42, %v362
  %v364 = vand.u32 %v363, 4294901760
  %v365 = vsub.f32 %v363, %v364
  %v366 = vand.u32 %v365, 4294901760
  %367 = vmatpush1.msra.mxu0 %v366
  %368 = vmatprep.subr.mxu0 0.0
  %v369 = vand.u32 %v43, 4294901760
  %v370 = vsub.f32 %v43, %v369
  %v371 = vand.u32 %v370, 4294901760
  %v372 = vsub.f32 %v370, %v371
  %v373 = vand.u32 %v372, 4294901760
  %374 = vmatpush1.msra.mxu0 %v373
  %375 = vmatprep.subr.mxu0 0.0
  %v376 = vand.u32 %v44, 4294901760
  %v377 = vsub.f32 %v44, %v376
  %v378 = vand.u32 %v377, 4294901760
  %v379 = vsub.f32 %v377, %v378
  %v380 = vand.u32 %v379, 4294901760
  %381 = vmatpush1.msra.mxu0 %v380
  %382 = vmatprep.subr.mxu0 0.0
  %v383 = vand.u32 %v45, 4294901760
  %v384 = vsub.f32 %v45, %v383
  %v385 = vand.u32 %v384, 4294901760
  %v386 = vsub.f32 %v384, %v385
  %v387 = vand.u32 %v386, 4294901760
  %388 = vmatpush1.msra.mxu0 %v387
  %389 = vmatprep.subr.mxu0 0.0
  %v390 = vand.u32 %v46, 4294901760
  %v391 = vsub.f32 %v46, %v390
  %v392 = vand.u32 %v391, 4294901760
  %v393 = vsub.f32 %v391, %v392
  %v394 = vand.u32 %v393, 4294901760
  %395 = vmatpush1.msra.mxu0 %v394
  %396 = vmatprep.subr.mxu0 0.0
  %v397 = vand.u32 %v47, 4294901760
  %v398 = vsub.f32 %v47, %v397
  %v399 = vand.u32 %v398, 4294901760
  %v400 = vsub.f32 %v398, %v399
  %v401 = vand.u32 %v400, 4294901760
  %402 = vmatpush1.msra.mxu0 %v401
  %403 = vmatprep.subr.mxu0 0.0
  %v404 = vand.u32 %v48, 4294901760
  %v405 = vsub.f32 %v48, %v404
  %v406 = vand.u32 %v405, 4294901760
  %v407 = vsub.f32 %v405, %v406
  %v408 = vand.u32 %v407, 4294901760
  %409 = vmatpush1.msra.mxu0 %v408
  %410 = vmatprep.subr.mxu0 0.0
  %411 = vmatpush1.msra.mxu0 0.0
  %412 = vmatprep.subr.mxu0 0.0
  %413 = vmatpush1.msra.mxu0 0.0
  %414 = vmatprep.subr.mxu0 0.0
  %415 = vmatpush1.msra.mxu0 0.0
  %416 = vmatprep.subr.mxu0 0.0
  %417 = vmatpush1.msra.mxu0 0.0
  %418 = vmatprep.subr.mxu0 0.0
  %419 = vmatpush1.msra.mxu0 0.0
  %v420 = vand.u32 %v58, 4294901760
  %421 = vmatprep.mubr.f32.mxu0 %v420
  %v422 = vand.u32 %v14, 4294901760
  %423 = vmatmul.mubr.f32.gmra.mrb[0].mxu0 %v422
  %v424 = vpop.f32.mrb[0].mxu0
  %v425 = vadd.f32 %v173, %v424
  %v426 = vpop.f32.mrb[0].mxu0
  %v427 = vand.u32 %v61, 4294901760
  %428 = vmatprep.mubr.f32.mxu0 %v427
  %v429 = vand.u32 %v16, 4294901760
  %430 = vmatmul.mubr.f32.gmra.mrb[0].mxu0 %v429
  %v431 = vpop.f32.mrb[0].mxu0
  %v432 = vadd.f32 %v188, %v431
  %v433 = vpop.f32.mrb[0].mxu0
  %v434 = vand.u32 %v64, 4294901760
  %435 = vmatprep.mubr.f32.mxu0 %v434
  %v436 = vand.u32 %v18, 4294901760
  %437 = vmatmul.mubr.f32.gmra.mrb[0].mxu0 %v436
  %v438 = vpop.f32.mrb[0].mxu0
  %v439 = vadd.f32 %v203, %v438
  %v440 = vpop.f32.mrb[0].mxu0
  %v441 = vand.u32 %v67, 4294901760
  %442 = vmatprep.mubr.f32.mxu0 %v441
  %v443 = vand.u32 %v20, 4294901760
  %444 = vmatmul.mubr.f32.gmra.mrb[0].mxu0 %v443
  %v445 = vpop.f32.mrb[0].mxu0
  %v446 = vadd.f32 %v218, %v445
  %v447 = vpop.f32.mrb[0].mxu0
  %448 = vdwg.mxu0
  %449 = vmatprep.subr.mxu0 0.0
  %v450 = vand.u32 %v22, 4294901760
  %v451 = vsub.f32 %v22, %v450
  %452 = vmatpush1.msra.mxu0 %v451
  %453 = vmatprep.subr.mxu0 0.0
  %v454 = vand.u32 %v23, 4294901760
  %v455 = vsub.f32 %v23, %v454
  %456 = vmatpush1.msra.mxu0 %v455
  %457 = vmatprep.subr.mxu0 0.0
  %v458 = vand.u32 %v24, 4294901760
  %v459 = vsub.f32 %v24, %v458
  %460 = vmatpush1.msra.mxu0 %v459
  %461 = vmatprep.subr.mxu0 0.0
  %v462 = vand.u32 %v25, 4294901760
  %v463 = vsub.f32 %v25, %v462
  %464 = vmatpush1.msra.mxu0 %v463
  %465 = vmatprep.subr.mxu0 0.0
  %v466 = vand.u32 %v26, 4294901760
  %v467 = vsub.f32 %v26, %v466
  %468 = vmatpush1.msra.mxu0 %v467
  %469 = vmatprep.subr.mxu0 0.0
  %v470 = vand.u32 %v27, 4294901760
  %v471 = vsub.f32 %v27, %v470
  %472 = vmatpush1.msra.mxu0 %v471
  %473 = vmatprep.subr.mxu0 0.0
  %v474 = vand.u32 %v28, 4294901760
  %v475 = vsub.f32 %v28, %v474
  %476 = vmatpush1.msra.mxu0 %v475
  %477 = vmatprep.subr.mxu0 0.0
  %v478 = vand.u32 %v29, 4294901760
  %v479 = vsub.f32 %v29, %v478
  %480 = vmatpush1.msra.mxu0 %v479
  %481 = vmatprep.subr.mxu0 0.0
  %v482 = vand.u32 %v30, 4294901760
  %v483 = vsub.f32 %v30, %v482
  %484 = vmatpush1.msra.mxu0 %v483
  %485 = vmatprep.subr.mxu0 0.0
  %v486 = vand.u32 %v31, 4294901760
  %v487 = vsub.f32 %v31, %v486
  %488 = vmatpush1.msra.mxu0 %v487
  %489 = vmatprep.subr.mxu0 0.0
  %v490 = vand.u32 %v32, 4294901760
  %v491 = vsub.f32 %v32, %v490
  %492 = vmatpush1.msra.mxu0 %v491
  %493 = vmatprep.subr.mxu0 0.0
  %v494 = vand.u32 %v33, 4294901760
  %v495 = vsub.f32 %v33, %v494
  %496 = vmatpush1.msra.mxu0 %v495
  %497 = vmatprep.subr.mxu0 0.0
  %v498 = vand.u32 %v34, 4294901760
  %v499 = vsub.f32 %v34, %v498
  %500 = vmatpush1.msra.mxu0 %v499
  %501 = vmatprep.subr.mxu0 0.0
  %v502 = vand.u32 %v35, 4294901760
  %v503 = vsub.f32 %v35, %v502
  %504 = vmatpush1.msra.mxu0 %v503
  %505 = vmatprep.subr.mxu0 0.0
  %v506 = vand.u32 %v36, 4294901760
  %v507 = vsub.f32 %v36, %v506
  %508 = vmatpush1.msra.mxu0 %v507
  %509 = vmatprep.subr.mxu0 0.0
  %v510 = vand.u32 %v37, 4294901760
  %v511 = vsub.f32 %v37, %v510
  %512 = vmatpush1.msra.mxu0 %v511
  %513 = vmatprep.subr.mxu0 0.0
  %v514 = vand.u32 %v38, 4294901760
  %v515 = vsub.f32 %v38, %v514
  %516 = vmatpush1.msra.mxu0 %v515
  %517 = vmatprep.subr.mxu0 0.0
  %v518 = vand.u32 %v39, 4294901760
  %v519 = vsub.f32 %v39, %v518
  %520 = vmatpush1.msra.mxu0 %v519
  %521 = vmatprep.subr.mxu0 0.0
  %v522 = vand.u32 %v40, 4294901760
  %v523 = vsub.f32 %v40, %v522
  %524 = vmatpush1.msra.mxu0 %v523
  %525 = vmatprep.subr.mxu0 0.0
  %v526 = vand.u32 %v41, 4294901760
  %v527 = vsub.f32 %v41, %v526
  %528 = vmatpush1.msra.mxu0 %v527
  %529 = vmatprep.subr.mxu0 0.0
  %v530 = vand.u32 %v42, 4294901760
  %v531 = vsub.f32 %v42, %v530
  %532 = vmatpush1.msra.mxu0 %v531
  %533 = vmatprep.subr.mxu0 0.0
  %v534 = vand.u32 %v43, 4294901760
  %v535 = vsub.f32 %v43, %v534
  %536 = vmatpush1.msra.mxu0 %v535
  %537 = vmatprep.subr.mxu0 0.0
  %v538 = vand.u32 %v44, 4294901760
  %v539 = vsub.f32 %v44, %v538
  %540 = vmatpush1.msra.mxu0 %v539
  %541 = vmatprep.subr.mxu0 0.0
  %v542 = vand.u32 %v45, 4294901760
  %v543 = vsub.f32 %v45, %v542
  %544 = vmatpush1.msra.mxu0 %v543
  %545 = vmatprep.subr.mxu0 0.0
  %v546 = vand.u32 %v46, 4294901760
  %v547 = vsub.f32 %v46, %v546
  %548 = vmatpush1.msra.mxu0 %v547
  %549 = vmatprep.subr.mxu0 0.0
  %v550 = vand.u32 %v47, 4294901760
  %v551 = vsub.f32 %v47, %v550
  %552 = vmatpush1.msra.mxu0 %v551
  %553 = vmatprep.subr.mxu0 0.0
  %v554 = vand.u32 %v48, 4294901760
  %v555 = vsub.f32 %v48, %v554
  %556 = vmatpush1.msra.mxu0 %v555
  %557 = vmatprep.subr.mxu0 0.0
  %558 = vmatpush1.msra.mxu0 0.0
  %559 = vmatprep.subr.mxu0 0.0
  %560 = vmatpush1.msra.mxu0 0.0
  %561 = vmatprep.subr.mxu0 0.0
  %562 = vmatpush1.msra.mxu0 0.0
  %563 = vmatprep.subr.mxu0 0.0
  %564 = vmatpush1.msra.mxu0 0.0
  %565 = vmatprep.subr.mxu0 0.0
  %566 = vmatpush1.msra.mxu0 0.0
  %v567 = vand.u32 %v58, 4294901760
  %v568 = vsub.f32 %v58, %v567
  %569 = vmatprep.mubr.f32.mxu0 %v568
  %v570 = vand.u32 %v14, 4294901760
  %v571 = vsub.f32 %v14, %v570
  %572 = vmatmul.mubr.f32.gmra.mrb[0].mxu0 %v571
  %v573 = vpop.f32.mrb[0].mxu0
  %v574 = vadd.f32 %v425, %v573
  %v575 = vpop.f32.mrb[0].mxu0
  %v576 = vand.u32 %v61, 4294901760
  %v577 = vsub.f32 %v61, %v576
  %578 = vmatprep.mubr.f32.mxu0 %v577
  %v579 = vand.u32 %v16, 4294901760
  %v580 = vsub.f32 %v16, %v579
  %581 = vmatmul.mubr.f32.gmra.mrb[0].mxu0 %v580
  %v582 = vpop.f32.mrb[0].mxu0
  %v583 = vadd.f32 %v432, %v582
  %v584 = vpop.f32.mrb[0].mxu0
  %v585 = vand.u32 %v64, 4294901760
  %v586 = vsub.f32 %v64, %v585
  %587 = vmatprep.mubr.f32.mxu0 %v586
  %v588 = vand.u32 %v18, 4294901760
  %v589 = vsub.f32 %v18, %v588
  %590 = vmatmul.mubr.f32.gmra.mrb[0].mxu0 %v589
  %v591 = vpop.f32.mrb[0].mxu0
  %v592 = vadd.f32 %v439, %v591
  %v593 = vpop.f32.mrb[0].mxu0
  %v594 = vand.u32 %v67, 4294901760
  %v595 = vsub.f32 %v67, %v594
  %596 = vmatprep.mubr.f32.mxu0 %v595
  %v597 = vand.u32 %v20, 4294901760
  %v598 = vsub.f32 %v20, %v597
  %599 = vmatmul.mubr.f32.gmra.mrb[0].mxu0 %v598
  %v600 = vpop.f32.mrb[0].mxu0
  %v601 = vadd.f32 %v446, %v600
  %v602 = vpop.f32.mrb[0].mxu0
  %603 = vdwg.mxu0
  %604 = vmatprep.subr.mxu0 0.0
  %v605 = vand.u32 %v22, 4294901760
  %606 = vmatpush1.msra.mxu0 %v605
  %607 = vmatprep.subr.mxu0 0.0
  %v608 = vand.u32 %v23, 4294901760
  %609 = vmatpush1.msra.mxu0 %v608
  %610 = vmatprep.subr.mxu0 0.0
  %v611 = vand.u32 %v24, 4294901760
  %612 = vmatpush1.msra.mxu0 %v611
  %613 = vmatprep.subr.mxu0 0.0
  %v614 = vand.u32 %v25, 4294901760
  %615 = vmatpush1.msra.mxu0 %v614
  %616 = vmatprep.subr.mxu0 0.0
  %v617 = vand.u32 %v26, 4294901760
  %618 = vmatpush1.msra.mxu0 %v617
  %619 = vmatprep.subr.mxu0 0.0
  %v620 = vand.u32 %v27, 4294901760
  %621 = vmatpush1.msra.mxu0 %v620
  %622 = vmatprep.subr.mxu0 0.0
  %v623 = vand.u32 %v28, 4294901760
  %624 = vmatpush1.msra.mxu0 %v623
  %625 = vmatprep.subr.mxu0 0.0
  %v626 = vand.u32 %v29, 4294901760
  %627 = vmatpush1.msra.mxu0 %v626
  %628 = vmatprep.subr.mxu0 0.0
  %v629 = vand.u32 %v30, 4294901760
  %630 = vmatpush1.msra.mxu0 %v629
  %631 = vmatprep.subr.mxu0 0.0
  %v632 = vand.u32 %v31, 4294901760
  %633 = vmatpush1.msra.mxu0 %v632
  %634 = vmatprep.subr.mxu0 0.0
  %v635 = vand.u32 %v32, 4294901760
  %636 = vmatpush1.msra.mxu0 %v635
  %637 = vmatprep.subr.mxu0 0.0
  %v638 = vand.u32 %v33, 4294901760
  %639 = vmatpush1.msra.mxu0 %v638
  %640 = vmatprep.subr.mxu0 0.0
  %v641 = vand.u32 %v34, 4294901760
  %642 = vmatpush1.msra.mxu0 %v641
  %643 = vmatprep.subr.mxu0 0.0
  %v644 = vand.u32 %v35, 4294901760
  %645 = vmatpush1.msra.mxu0 %v644
  %646 = vmatprep.subr.mxu0 0.0
  %v647 = vand.u32 %v36, 4294901760
  %648 = vmatpush1.msra.mxu0 %v647
  %649 = vmatprep.subr.mxu0 0.0
  %v650 = vand.u32 %v37, 4294901760
  %651 = vmatpush1.msra.mxu0 %v650
  %652 = vmatprep.subr.mxu0 0.0
  %v653 = vand.u32 %v38, 4294901760
  %654 = vmatpush1.msra.mxu0 %v653
  %655 = vmatprep.subr.mxu0 0.0
  %v656 = vand.u32 %v39, 4294901760
  %657 = vmatpush1.msra.mxu0 %v656
  %658 = vmatprep.subr.mxu0 0.0
  %v659 = vand.u32 %v40, 4294901760
  %660 = vmatpush1.msra.mxu0 %v659
  %661 = vmatprep.subr.mxu0 0.0
  %v662 = vand.u32 %v41, 4294901760
  %663 = vmatpush1.msra.mxu0 %v662
  %664 = vmatprep.subr.mxu0 0.0
  %v665 = vand.u32 %v42, 4294901760
  %666 = vmatpush1.msra.mxu0 %v665
  %667 = vmatprep.subr.mxu0 0.0
  %v668 = vand.u32 %v43, 4294901760
  %669 = vmatpush1.msra.mxu0 %v668
  %670 = vmatprep.subr.mxu0 0.0
  %v671 = vand.u32 %v44, 4294901760
  %672 = vmatpush1.msra.mxu0 %v671
  %673 = vmatprep.subr.mxu0 0.0
  %v674 = vand.u32 %v45, 4294901760
  %675 = vmatpush1.msra.mxu0 %v674
  %676 = vmatprep.subr.mxu0 0.0
  %v677 = vand.u32 %v46, 4294901760
  %678 = vmatpush1.msra.mxu0 %v677
  %679 = vmatprep.subr.mxu0 0.0
  %v680 = vand.u32 %v47, 4294901760
  %681 = vmatpush1.msra.mxu0 %v680
  %682 = vmatprep.subr.mxu0 0.0
  %v683 = vand.u32 %v48, 4294901760
  %684 = vmatpush1.msra.mxu0 %v683
  %685 = vmatprep.subr.mxu0 0.0
  %686 = vmatpush1.msra.mxu0 0.0
  %687 = vmatprep.subr.mxu0 0.0
  %688 = vmatpush1.msra.mxu0 0.0
  %689 = vmatprep.subr.mxu0 0.0
  %690 = vmatpush1.msra.mxu0 0.0
  %691 = vmatprep.subr.mxu0 0.0
  %692 = vmatpush1.msra.mxu0 0.0
  %693 = vmatprep.subr.mxu0 0.0
  %694 = vmatpush1.msra.mxu0 0.0
  %v695 = vand.u32 %v58, 4294901760
  %v696 = vsub.f32 %v58, %v695
  %v697 = vand.u32 %v696, 4294901760
  %698 = vmatprep.mubr.f32.mxu0 %v697
  %v699 = vand.u32 %v14, 4294901760
  %v700 = vsub.f32 %v14, %v699
  %v701 = vand.u32 %v700, 4294901760
  %702 = vmatmul.mubr.f32.gmra.mrb[0].mxu0 %v701
  %v703 = vpop.f32.mrb[0].mxu0
  %v704 = vadd.f32 %v574, %v703
  %v705 = vpop.f32.mrb[0].mxu0
  %v706 = vand.u32 %v61, 4294901760
  %v707 = vsub.f32 %v61, %v706
  %v708 = vand.u32 %v707, 4294901760
  %709 = vmatprep.mubr.f32.mxu0 %v708
  %v710 = vand.u32 %v16, 4294901760
  %v711 = vsub.f32 %v16, %v710
  %v712 = vand.u32 %v711, 4294901760
  %713 = vmatmul.mubr.f32.gmra.mrb[0].mxu0 %v712
  %v714 = vpop.f32.mrb[0].mxu0
  %v715 = vadd.f32 %v583, %v714
  %v716 = vpop.f32.mrb[0].mxu0
  %v717 = vand.u32 %v64, 4294901760
  %v718 = vsub.f32 %v64, %v717
  %v719 = vand.u32 %v718, 4294901760
  %720 = vmatprep.mubr.f32.mxu0 %v719
  %v721 = vand.u32 %v18, 4294901760
  %v722 = vsub.f32 %v18, %v721
  %v723 = vand.u32 %v722, 4294901760
  %724 = vmatmul.mubr.f32.gmra.mrb[0].mxu0 %v723
  %v725 = vpop.f32.mrb[0].mxu0
  %v726 = vadd.f32 %v592, %v725
  %v727 = vpop.f32.mrb[0].mxu0
  %v728 = vand.u32 %v67, 4294901760
  %v729 = vsub.f32 %v67, %v728
  %v730 = vand.u32 %v729, 4294901760
  %731 = vmatprep.mubr.f32.mxu0 %v730
  %v732 = vand.u32 %v20, 4294901760
  %v733 = vsub.f32 %v20, %v732
  %v734 = vand.u32 %v733, 4294901760
  %735 = vmatmul.mubr.f32.gmra.mrb[0].mxu0 %v734
  %v736 = vpop.f32.mrb[0].mxu0
  %v737 = vadd.f32 %v601, %v736
  %v738 = vpop.f32.mrb[0].mxu0
  %739 = vdwg.mxu0
  %740 = vmatprep.subr.mxu0 0.0
  %v741 = vand.u32 %v22, 4294901760
  %v742 = vsub.f32 %v22, %v741
  %v743 = vand.u32 %v742, 4294901760
  %744 = vmatpush1.msra.mxu0 %v743
  %745 = vmatprep.subr.mxu0 0.0
  %v746 = vand.u32 %v23, 4294901760
  %v747 = vsub.f32 %v23, %v746
  %v748 = vand.u32 %v747, 4294901760
  %749 = vmatpush1.msra.mxu0 %v748
  %750 = vmatprep.subr.mxu0 0.0
  %v751 = vand.u32 %v24, 4294901760
  %v752 = vsub.f32 %v24, %v751
  %v753 = vand.u32 %v752, 4294901760
  %754 = vmatpush1.msra.mxu0 %v753
  %755 = vmatprep.subr.mxu0 0.0
  %v756 = vand.u32 %v25, 4294901760
  %v757 = vsub.f32 %v25, %v756
  %v758 = vand.u32 %v757, 4294901760
  %759 = vmatpush1.msra.mxu0 %v758
  %760 = vmatprep.subr.mxu0 0.0
  %v761 = vand.u32 %v26, 4294901760
  %v762 = vsub.f32 %v26, %v761
  %v763 = vand.u32 %v762, 4294901760
  %764 = vmatpush1.msra.mxu0 %v763
  %765 = vmatprep.subr.mxu0 0.0
  %v766 = vand.u32 %v27, 4294901760
  %v767 = vsub.f32 %v27, %v766
  %v768 = vand.u32 %v767, 4294901760
  %769 = vmatpush1.msra.mxu0 %v768
  %770 = vmatprep.subr.mxu0 0.0
  %v771 = vand.u32 %v28, 4294901760
  %v772 = vsub.f32 %v28, %v771
  %v773 = vand.u32 %v772, 4294901760
  %774 = vmatpush1.msra.mxu0 %v773
  %775 = vmatprep.subr.mxu0 0.0
  %v776 = vand.u32 %v29, 4294901760
  %v777 = vsub.f32 %v29, %v776
  %v778 = vand.u32 %v777, 4294901760
  %779 = vmatpush1.msra.mxu0 %v778
  %780 = vmatprep.subr.mxu0 0.0
  %v781 = vand.u32 %v30, 4294901760
  %v782 = vsub.f32 %v30, %v781
  %v783 = vand.u32 %v782, 4294901760
  %784 = vmatpush1.msra.mxu0 %v783
  %785 = vmatprep.subr.mxu0 0.0
  %v786 = vand.u32 %v31, 4294901760
  %v787 = vsub.f32 %v31, %v786
  %v788 = vand.u32 %v787, 4294901760
  %789 = vmatpush1.msra.mxu0 %v788
  %790 = vmatprep.subr.mxu0 0.0
  %v791 = vand.u32 %v32, 4294901760
  %v792 = vsub.f32 %v32, %v791
  %v793 = vand.u32 %v792, 4294901760
  %794 = vmatpush1.msra.mxu0 %v793
  %795 = vmatprep.subr.mxu0 0.0
  %v796 = vand.u32 %v33, 4294901760
  %v797 = vsub.f32 %v33, %v796
  %v798 = vand.u32 %v797, 4294901760
  %799 = vmatpush1.msra.mxu0 %v798
  %800 = vmatprep.subr.mxu0 0.0
  %v801 = vand.u32 %v34, 4294901760
  %v802 = vsub.f32 %v34, %v801
  %v803 = vand.u32 %v802, 4294901760
  %804 = vmatpush1.msra.mxu0 %v803
  %805 = vmatprep.subr.mxu0 0.0
  %v806 = vand.u32 %v35, 4294901760
  %v807 = vsub.f32 %v35, %v806
  %v808 = vand.u32 %v807, 4294901760
  %809 = vmatpush1.msra.mxu0 %v808
  %810 = vmatprep.subr.mxu0 0.0
  %v811 = vand.u32 %v36, 4294901760
  %v812 = vsub.f32 %v36, %v811
  %v813 = vand.u32 %v812, 4294901760
  %814 = vmatpush1.msra.mxu0 %v813
  %815 = vmatprep.subr.mxu0 0.0
  %v816 = vand.u32 %v37, 4294901760
  %v817 = vsub.f32 %v37, %v816
  %v818 = vand.u32 %v817, 4294901760
  %819 = vmatpush1.msra.mxu0 %v818
  %820 = vmatprep.subr.mxu0 0.0
  %v821 = vand.u32 %v38, 4294901760
  %v822 = vsub.f32 %v38, %v821
  %v823 = vand.u32 %v822, 4294901760
  %824 = vmatpush1.msra.mxu0 %v823
  %825 = vmatprep.subr.mxu0 0.0
  %v826 = vand.u32 %v39, 4294901760
  %v827 = vsub.f32 %v39, %v826
  %v828 = vand.u32 %v827, 4294901760
  %829 = vmatpush1.msra.mxu0 %v828
  %830 = vmatprep.subr.mxu0 0.0
  %v831 = vand.u32 %v40, 4294901760
  %v832 = vsub.f32 %v40, %v831
  %v833 = vand.u32 %v832, 4294901760
  %834 = vmatpush1.msra.mxu0 %v833
  %835 = vmatprep.subr.mxu0 0.0
  %v836 = vand.u32 %v41, 4294901760
  %v837 = vsub.f32 %v41, %v836
  %v838 = vand.u32 %v837, 4294901760
  %839 = vmatpush1.msra.mxu0 %v838
  %840 = vmatprep.subr.mxu0 0.0
  %v841 = vand.u32 %v42, 4294901760
  %v842 = vsub.f32 %v42, %v841
  %v843 = vand.u32 %v842, 4294901760
  %844 = vmatpush1.msra.mxu0 %v843
  %845 = vmatprep.subr.mxu0 0.0
  %v846 = vand.u32 %v43, 4294901760
  %v847 = vsub.f32 %v43, %v846
  %v848 = vand.u32 %v847, 4294901760
  %849 = vmatpush1.msra.mxu0 %v848
  %850 = vmatprep.subr.mxu0 0.0
  %v851 = vand.u32 %v44, 4294901760
  %v852 = vsub.f32 %v44, %v851
  %v853 = vand.u32 %v852, 4294901760
  %854 = vmatpush1.msra.mxu0 %v853
  %855 = vmatprep.subr.mxu0 0.0
  %v856 = vand.u32 %v45, 4294901760
  %v857 = vsub.f32 %v45, %v856
  %v858 = vand.u32 %v857, 4294901760
  %859 = vmatpush1.msra.mxu0 %v858
  %860 = vmatprep.subr.mxu0 0.0
  %v861 = vand.u32 %v46, 4294901760
  %v862 = vsub.f32 %v46, %v861
  %v863 = vand.u32 %v862, 4294901760
  %864 = vmatpush1.msra.mxu0 %v863
  %865 = vmatprep.subr.mxu0 0.0
  %v866 = vand.u32 %v47, 4294901760
  %v867 = vsub.f32 %v47, %v866
  %v868 = vand.u32 %v867, 4294901760
  %869 = vmatpush1.msra.mxu0 %v868
  %870 = vmatprep.subr.mxu0 0.0
  %v871 = vand.u32 %v48, 4294901760
  %v872 = vsub.f32 %v48, %v871
  %v873 = vand.u32 %v872, 4294901760
  %874 = vmatpush1.msra.mxu0 %v873
  %875 = vmatprep.subr.mxu0 0.0
  %876 = vmatpush1.msra.mxu0 0.0
  %877 = vmatprep.subr.mxu0 0.0
  %878 = vmatpush1.msra.mxu0 0.0
  %879 = vmatprep.subr.mxu0 0.0
  %880 = vmatpush1.msra.mxu0 0.0
  %881 = vmatprep.subr.mxu0 0.0
  %882 = vmatpush1.msra.mxu0 0.0
  %883 = vmatprep.subr.mxu0 0.0
  %884 = vmatpush1.msra.mxu0 0.0
  %v885 = vand.u32 %v58, 4294901760
  %886 = vmatprep.mubr.f32.mxu0 %v885
  %v887 = vand.u32 %v14, 4294901760
  %888 = vmatmul.mubr.f32.gmra.mrb[0].mxu0 %v887
  %v889 = vpop.f32.mrb[0].mxu0
  %v890 = vadd.f32 %v704, %v889
  %v891 = vpop.f32.mrb[0].mxu0
  %v892 = vand.u32 %v61, 4294901760
  %893 = vmatprep.mubr.f32.mxu0 %v892
  %v894 = vand.u32 %v16, 4294901760
  %895 = vmatmul.mubr.f32.gmra.mrb[0].mxu0 %v894
  %v896 = vpop.f32.mrb[0].mxu0
  %v897 = vadd.f32 %v715, %v896
  %v898 = vpop.f32.mrb[0].mxu0
  %v899 = vand.u32 %v64, 4294901760
  %900 = vmatprep.mubr.f32.mxu0 %v899
  %v901 = vand.u32 %v18, 4294901760
  %902 = vmatmul.mubr.f32.gmra.mrb[0].mxu0 %v901
  %v903 = vpop.f32.mrb[0].mxu0
  %v904 = vadd.f32 %v726, %v903
  %v905 = vpop.f32.mrb[0].mxu0
  %v906 = vand.u32 %v67, 4294901760
  %907 = vmatprep.mubr.f32.mxu0 %v906
  %v908 = vand.u32 %v20, 4294901760
  %909 = vmatmul.mubr.f32.gmra.mrb[0].mxu0 %v908
  %v910 = vpop.f32.mrb[0].mxu0
  %v911 = vadd.f32 %v737, %v910
  %v912 = vpop.f32.mrb[0].mxu0
  %913 = vdwg.mxu0
  %914 = vmatprep.subr.mxu0 0.0
  %v915 = vand.u32 %v22, 4294901760
  %916 = vmatpush1.msra.mxu0 %v915
  %917 = vmatprep.subr.mxu0 0.0
  %v918 = vand.u32 %v23, 4294901760
  %919 = vmatpush1.msra.mxu0 %v918
  %920 = vmatprep.subr.mxu0 0.0
  %v921 = vand.u32 %v24, 4294901760
  %922 = vmatpush1.msra.mxu0 %v921
  %923 = vmatprep.subr.mxu0 0.0
  %v924 = vand.u32 %v25, 4294901760
  %925 = vmatpush1.msra.mxu0 %v924
  %926 = vmatprep.subr.mxu0 0.0
  %v927 = vand.u32 %v26, 4294901760
  %928 = vmatpush1.msra.mxu0 %v927
  %929 = vmatprep.subr.mxu0 0.0
  %v930 = vand.u32 %v27, 4294901760
  %931 = vmatpush1.msra.mxu0 %v930
  %932 = vmatprep.subr.mxu0 0.0
  %v933 = vand.u32 %v28, 4294901760
  %934 = vmatpush1.msra.mxu0 %v933
  %935 = vmatprep.subr.mxu0 0.0
  %v936 = vand.u32 %v29, 4294901760
  %937 = vmatpush1.msra.mxu0 %v936
  %938 = vmatprep.subr.mxu0 0.0
  %v939 = vand.u32 %v30, 4294901760
  %940 = vmatpush1.msra.mxu0 %v939
  %941 = vmatprep.subr.mxu0 0.0
  %v942 = vand.u32 %v31, 4294901760
  %943 = vmatpush1.msra.mxu0 %v942
  %944 = vmatprep.subr.mxu0 0.0
  %v945 = vand.u32 %v32, 4294901760
  %946 = vmatpush1.msra.mxu0 %v945
  %947 = vmatprep.subr.mxu0 0.0
  %v948 = vand.u32 %v33, 4294901760
  %949 = vmatpush1.msra.mxu0 %v948
  %950 = vmatprep.subr.mxu0 0.0
  %v951 = vand.u32 %v34, 4294901760
  %952 = vmatpush1.msra.mxu0 %v951
  %953 = vmatprep.subr.mxu0 0.0
  %v954 = vand.u32 %v35, 4294901760
  %955 = vmatpush1.msra.mxu0 %v954
  %956 = vmatprep.subr.mxu0 0.0
  %v957 = vand.u32 %v36, 4294901760
  %958 = vmatpush1.msra.mxu0 %v957
  %959 = vmatprep.subr.mxu0 0.0
  %v960 = vand.u32 %v37, 4294901760
  %961 = vmatpush1.msra.mxu0 %v960
  %962 = vmatprep.subr.mxu0 0.0
  %v963 = vand.u32 %v38, 4294901760
  %964 = vmatpush1.msra.mxu0 %v963
  %965 = vmatprep.subr.mxu0 0.0
  %v966 = vand.u32 %v39, 4294901760
  %967 = vmatpush1.msra.mxu0 %v966
  %968 = vmatprep.subr.mxu0 0.0
  %v969 = vand.u32 %v40, 4294901760
  %970 = vmatpush1.msra.mxu0 %v969
  %971 = vmatprep.subr.mxu0 0.0
  %v972 = vand.u32 %v41, 4294901760
  %973 = vmatpush1.msra.mxu0 %v972
  %974 = vmatprep.subr.mxu0 0.0
  %v975 = vand.u32 %v42, 4294901760
  %976 = vmatpush1.msra.mxu0 %v975
  %977 = vmatprep.subr.mxu0 0.0
  %v978 = vand.u32 %v43, 4294901760
  %979 = vmatpush1.msra.mxu0 %v978
  %980 = vmatprep.subr.mxu0 0.0
  %v981 = vand.u32 %v44, 4294901760
  %982 = vmatpush1.msra.mxu0 %v981
  %983 = vmatprep.subr.mxu0 0.0
  %v984 = vand.u32 %v45, 4294901760
  %985 = vmatpush1.msra.mxu0 %v984
  %986 = vmatprep.subr.mxu0 0.0
  %v987 = vand.u32 %v46, 4294901760
  %988 = vmatpush1.msra.mxu0 %v987
  %989 = vmatprep.subr.mxu0 0.0
  %v990 = vand.u32 %v47, 4294901760
  %991 = vmatpush1.msra.mxu0 %v990
  %992 = vmatprep.subr.mxu0 0.0
  %v993 = vand.u32 %v48, 4294901760
  %994 = vmatpush1.msra.mxu0 %v993
  %995 = vmatprep.subr.mxu0 0.0
  %996 = vmatpush1.msra.mxu0 0.0
  %997 = vmatprep.subr.mxu0 0.0
  %998 = vmatpush1.msra.mxu0 0.0
  %999 = vmatprep.subr.mxu0 0.0
  %1000 = vmatpush1.msra.mxu0 0.0
  %1001 = vmatprep.subr.mxu0 0.0
  %1002 = vmatpush1.msra.mxu0 0.0
  %1003 = vmatprep.subr.mxu0 0.0
  %1004 = vmatpush1.msra.mxu0 0.0
  %v1005 = vand.u32 %v58, 4294901760
  %1006 = vmatprep.mubr.f32.mxu0 %v1005
  %v1007 = vand.u32 %v14, 4294901760
  %1008 = vmatmul.mubr.f32.gmra.mrb[0].mxu0 %v1007
  %v1009 = vpop.f32.mrb[0].mxu0
  %v1010 = vadd.f32 %v890, %v1009
  %v1011 = vpop.f32.mrb[0].mxu0
  %v1012 = vand.u32 %v61, 4294901760
  %1013 = vmatprep.mubr.f32.mxu0 %v1012
  %v1014 = vand.u32 %v16, 4294901760
  %1015 = vmatmul.mubr.f32.gmra.mrb[0].mxu0 %v1014
  %v1016 = vpop.f32.mrb[0].mxu0
  %v1017 = vadd.f32 %v897, %v1016
  %v1018 = vpop.f32.mrb[0].mxu0
  %v1019 = vand.u32 %v64, 4294901760
  %1020 = vmatprep.mubr.f32.mxu0 %v1019
  %v1021 = vand.u32 %v18, 4294901760
  %1022 = vmatmul.mubr.f32.gmra.mrb[0].mxu0 %v1021
  %v1023 = vpop.f32.mrb[0].mxu0
  %v1024 = vadd.f32 %v904, %v1023
  %v1025 = vpop.f32.mrb[0].mxu0
  %v1026 = vand.u32 %v67, 4294901760
  %1027 = vmatprep.mubr.f32.mxu0 %v1026
  %v1028 = vand.u32 %v20, 4294901760
  %1029 = vmatmul.mubr.f32.gmra.mrb[0].mxu0 %v1028
  %v1030 = vpop.f32.mrb[0].mxu0
  %v1031 = vadd.f32 %v911, %v1030
  %v1032 = vpop.f32.mrb[0].mxu0
  %1033 = vdwg.mxu0
  %1034 = vst [vmem:[%s3] sm:$0xff] %v1010
  %1035 = vst [vmem:[%s3 + $0x8] sm:$0xff] %v1017
  %1036 = vst [vmem:[%s3 + $0x10] sm:$0xff] %v1024
  %1037 = vst [vmem:[%s3 + $0x18] sm:$0xff] %v1031
  // Predicated region
  $region14: #{split_conv2d_forward.1} parent=0 // pred_check
    _
  $region15: #{split_conv2d_forward.1} parent=0 // pred_check_branch
    %1039 = sbr.rel (0) target = $region17
  $region16: #{split_conv2d_forward.1} parent=0 // pred_region
    _
  $region17: #{split_conv2d_forward.1} parent=0 // pred_fallthru
    _
  // Predicated region
  $region18: #{split_conv2d_forward.1} parent=0 // pred_check
    _
  $region19: #{split_conv2d_forward.1} parent=0 // pred_check_branch
    %1041 = sbr.rel (0) target = $region21
  $region20: #{split_conv2d_forward.1} parent=0 // pred_region
    _
  $region21: #{split_conv2d_forward.1} parent=0 // pred_fallthru
    _

</llo_original>
